<compile_context>
chip_gen: v7x
topology: tpu7x:2x2x1
jax: 0.10.0
libtpu: 0.0.40
codegen_flags: <defaults>
</compile_context>

<pallas_src>
import functools

import jax
import jax.numpy as jnp
from jax.experimental import pallas as pl
from jax.experimental.pallas import tpu as pltpu

BN_EPS = 1e-5

_TM = 256   # batch (sublane) tile, multiple of 8
_TN = 256   # hidden / output-lane tile, multiple of 128
_TK = 512   # in_channels reduction tile, multiple of 128


def _round_up(a: int, b: int) -> int:
    return (a + b - 1) // b * b


# ---------------------------------------------------------------------------
# Pass 1: batch stats + BN fold.  Grid = (C/tk, N/tm), N innermost reduction.
# Outputs scale/shift directly (BN folded into one per-channel affine).
# ---------------------------------------------------------------------------
def _bn_fold_kernel(x_ref, gamma_ref, beta_ref, scale_ref, shift_ref,
                    s_ref, ss_ref, *, inv_n):
    ni = pl.program_id(1)

    @pl.when(ni == 0)
    def _init():
        s_ref[...] = jnp.zeros_like(s_ref)
        ss_ref[...] = jnp.zeros_like(ss_ref)

    x = x_ref[...]                                       # (tm, tk) f32
    s_ref[...] += jnp.sum(x, axis=0, keepdims=True)
    ss_ref[...] += jnp.sum(x * x, axis=0, keepdims=True)

    @pl.when(ni == pl.num_programs(1) - 1)
    def _finalize():
        mean = s_ref[...] * inv_n
        var = jnp.maximum(ss_ref[...] * inv_n - mean * mean, 0.0)  # biased, one-pass
        inv_std = jax.lax.rsqrt(var + BN_EPS)
        scale = gamma_ref[...] * inv_std
        scale_ref[...] = scale
        shift_ref[...] = beta_ref[...] - mean * scale


# ---------------------------------------------------------------------------
# Pass 2: fused (folded-BN affine -> ReLU -> matmul), C innermost reduction.
# ---------------------------------------------------------------------------
def _preact_matmul_kernel(x_ref, scale_ref, shift_ref, wt_ref, o_ref, acc_ref):
    k = pl.program_id(2)

    @pl.when(k == 0)
    def _init():
        acc_ref[...] = jnp.zeros_like(acc_ref)

    # BN affine + ReLU stay f32 on the VPU (v5e has no bf16 VPU); MXU gets bf16.
    y = jnp.maximum(x_ref[...] * scale_ref[...] + shift_ref[...], 0.0)
    acc_ref[...] += jnp.dot(y.astype(jnp.bfloat16), wt_ref[...],
                            preferred_element_type=jnp.float32)

    @pl.when(k == pl.num_programs(2) - 1)
    def _store():
        o_ref[...] = acc_ref[...].astype(o_ref.dtype)


# ---------------------------------------------------------------------------
# Wrapper
# ---------------------------------------------------------------------------
def prepare_fc1_weight(fc1_weight):
    """One-time (init-time) prep: PyTorch (H, C) -> (C, H) in bf16 for the MXU."""
    return jnp.asarray(fc1_weight).T.astype(jnp.bfloat16)


@jax.jit
def linear_path_preact(x, bn_gamma, bn_beta, fc1_weight_t):
    """x: (N, C) f32; bn_gamma/bn_beta: (C,); fc1_weight_t: (C, H) bf16 (pre-transposed)."""
    n, c = x.shape
    cw, h = fc1_weight_t.shape
    assert cw == c, "weight in_channels mismatch"

    x = x.astype(jnp.float32)

    # Effective tiles: respect (8, 128) granularity, capped by defaults.
    tm = min(_TM, _round_up(n, 8))
    tn = min(_TN, _round_up(h, 128))
    tk = min(_TK, _round_up(c, 128))
    n_pad = _round_up(n, tm)
    h_pad = _round_up(h, tn)
    c_pad = _round_up(c, tk)

    # Zero-pad to lane/sublane-dense shapes.  Padded channels get zero gamma/beta
    # and zero weight rows; padded batch rows are sliced off -> no effect on output.
    if (n_pad, c_pad) != (n, c):
        x = jnp.pad(x, ((0, n_pad - n), (0, c_pad - c)))
    wt = fc1_weight_t.astype(jnp.bfloat16)
    if (c_pad, h_pad) != (c, h):
        wt = jnp.pad(wt, ((0, c_pad - c), (0, h_pad - h)))
    gamma = jnp.pad(bn_gamma.astype(jnp.float32), (0, c_pad - c)).reshape(1, c_pad)
    beta = jnp.pad(bn_beta.astype(jnp.float32), (0, c_pad - c)).reshape(1, c_pad)

    # ---- Pass 1: batch stats over the true batch, BN folded in-kernel. ----
    # Padded batch rows are zero so the sums are exact; divide by the true N.
    scale, shift = pl.pallas_call(
        functools.partial(_bn_fold_kernel, inv_n=1.0 / float(n)),
        out_shape=(jax.ShapeDtypeStruct((1, c_pad), jnp.float32),
                   jax.ShapeDtypeStruct((1, c_pad), jnp.float32)),
        grid=(c_pad // tk, n_pad // tm),
        in_specs=[
            pl.BlockSpec((tm, tk), lambda ci, ni: (ni, ci)),   # x tile
            pl.BlockSpec((1, tk), lambda ci, ni: (0, ci)),     # gamma
            pl.BlockSpec((1, tk), lambda ci, ni: (0, ci)),     # beta
        ],
        out_specs=(pl.BlockSpec((1, tk), lambda ci, ni: (0, ci)),
                   pl.BlockSpec((1, tk), lambda ci, ni: (0, ci))),
        scratch_shapes=[pltpu.VMEM((1, tk), jnp.float32),
                        pltpu.VMEM((1, tk), jnp.float32)],
        compiler_params=pltpu.CompilerParams(
            dimension_semantics=("parallel", "arbitrary")),
    )(x, gamma, beta)

    # ---- Pass 2: tiled GEMM with fused affine + ReLU. ----
    out = pl.pallas_call(
        _preact_matmul_kernel,
        out_shape=jax.ShapeDtypeStruct((n_pad, h_pad), jnp.float32),
        grid=(n_pad // tm, h_pad // tn, c_pad // tk),
        in_specs=[
            pl.BlockSpec((tm, tk), lambda i, j, k: (i, k)),   # x tile
            pl.BlockSpec((1, tk), lambda i, j, k: (0, k)),    # scale
            pl.BlockSpec((1, tk), lambda i, j, k: (0, k)),    # shift
            pl.BlockSpec((tk, tn), lambda i, j, k: (k, j)),   # Wt tile (bf16)
        ],
        out_specs=pl.BlockSpec((tm, tn), lambda i, j, k: (i, j)),
        scratch_shapes=[pltpu.VMEM((tm, tn), jnp.float32)],
        compiler_params=pltpu.CompilerParams(
            dimension_semantics=("parallel", "parallel", "arbitrary"),
            vmem_limit_bytes=32 * 1024 * 1024),
    )(x, scale, shift, wt)

    return out[:n, :h]


# ---------------------------------------------------------------------------
# Pure-JAX reference (f32 throughout, two-pass variance).
# ---------------------------------------------------------------------------
def _reference(x, bn_gamma, bn_beta, fc1_weight):
    mean = jnp.mean(x, axis=0, keepdims=True)
    var = jnp.mean((x - mean) ** 2, axis=0, keepdims=True)
    x_hat = (x - mean) / jnp.sqrt(var + BN_EPS)
    y = jnp.maximum(x_hat * bn_gamma[None, :] + bn_beta[None, :], 0.0)
    return y @ fc1_weight.T


if __name__ == "__main__":
    batch = 8
    in_channels = 16
    hidden_channels = 32

    key = jax.random.PRNGKey(0)
    kx, kw = jax.random.split(key)

    x = jax.random.normal(kx, (batch, in_channels), dtype=jnp.float32)

    # PyTorch defaults: BN gamma=1, beta=0; Linear weight ~ U(-1/sqrt(in), 1/sqrt(in)).
    bn_gamma = jnp.ones((in_channels,), dtype=jnp.float32)
    bn_beta = jnp.zeros((in_channels,), dtype=jnp.float32)
    bound = 1.0 / (in_channels ** 0.5)
    fc1_weight = jax.random.uniform(
        kw, (hidden_channels, in_channels), minval=-bound, maxval=bound,
        dtype=jnp.float32)

    # One-time weight prep (transpose + bf16) outside the hot path.
    fc1_weight_t = prepare_fc1_weight(fc1_weight)

    out = linear_path_preact(x, bn_gamma, bn_beta, fc1_weight_t)
    out = jax.block_until_ready(out)

    ref = _reference(x, bn_gamma, bn_beta, fc1_weight)
    assert out.shape == (batch, hidden_channels)
    # bf16 MXU operands (f32 accumulation) -> relaxed tolerance vs the f32 reference.
    assert jnp.allclose(out, ref, atol=5e-2, rtol=5e-2), \
        float(jnp.max(jnp.abs(out - ref)))

    # TODO(synk): BatchNorm1d's running_mean/running_var momentum update (a training-mode
    # side effect not returned by forward()) is not replicated here.
    print("KERNEL_OK")
</pallas_src>

<mosaic_0001>
module attributes {stable_mosaic.version = 11 : i64} {
  func.func @_bn_fold_kernel(%arg0: i32, %arg1: i32, %arg2: memref<8x128xf32, #tpu.memory_space<vmem>>, %arg3: memref<1x128xf32, #tpu.memory_space<vmem>>, %arg4: memref<1x128xf32, #tpu.memory_space<vmem>>, %arg5: memref<1x128xf32, #tpu.memory_space<vmem>>, %arg6: memref<1x128xf32, #tpu.memory_space<vmem>>, %arg7: memref<1x128xf32, #tpu.memory_space<vmem>>, %arg8: memref<1x128xf32, #tpu.memory_space<vmem>>) attributes {dimension_semantics = [#tpu.dimension_semantics<parallel>, #tpu.dimension_semantics<arbitrary>], iteration_bounds = array<i64: 1, 1>, scalar_prefetch = 0 : i64, scratch_operands = 2 : i64, tpu.core_type = #tpu.core_type<tc>, window_params = [{transform_indices = @transform_0, window_bounds = array<i64: 8, 128>}, {transform_indices = @transform_1, window_bounds = array<i64: 1, 128>}, {transform_indices = @transform_2, window_bounds = array<i64: 1, 128>}, {transform_indices = @transform_3, window_bounds = array<i64: 1, 128>}, {transform_indices = @transform_4, window_bounds = array<i64: 1, 128>}]} {
    %c0_i32 = arith.constant 0 : i32
    %0 = arith.cmpi eq, %arg1, %c0_i32 : i32
    %1 = arith.extui %0 : i1 to i32
    %c0_i32_0 = arith.constant 0 : i32
    %2 = arith.cmpi ne, %1, %c0_i32_0 : i32
    scf.if %2 {
      %cst_13 = arith.constant 0.000000e+00 : f32
      %18 = vector.broadcast %cst_13 : f32 to vector<1x128xf32>
      %c0_14 = arith.constant 0 : index
      %c0_15 = arith.constant 0 : index
      %19 = vector.load %arg7[%c0_14, %c0_15] : memref<1x128xf32, #tpu.memory_space<vmem>>, vector<1x128xf32>
      tpu.vector_store %arg7[%c0_14, %c0_15], %18 {strides = array<i32>} : memref<1x128xf32, #tpu.memory_space<vmem>>, vector<1x128xf32>,
      %cst_16 = arith.constant 0.000000e+00 : f32
      %20 = vector.broadcast %cst_16 : f32 to vector<1x128xf32>
      %c0_17 = arith.constant 0 : index
      %c0_18 = arith.constant 0 : index
      %21 = vector.load %arg8[%c0_17, %c0_18] : memref<1x128xf32, #tpu.memory_space<vmem>>, vector<1x128xf32>
      tpu.vector_store %arg8[%c0_17, %c0_18], %20 {strides = array<i32>} : memref<1x128xf32, #tpu.memory_space<vmem>>, vector<1x128xf32>,
    } else {
    }
    %c0 = arith.constant 0 : index
    %c0_1 = arith.constant 0 : index
    %3 = vector.load %arg2[%c0, %c0_1] : memref<8x128xf32, #tpu.memory_space<vmem>>, vector<8x128xf32>
    %c0_2 = arith.constant 0 : index
    %c0_3 = arith.constant 0 : index
    %4 = vector.load %arg7[%c0_2, %c0_3] : memref<1x128xf32, #tpu.memory_space<vmem>>, vector<1x128xf32>
    %cst = arith.constant dense<0.000000e+00> : vector<128xf32>
    %5 = vector.multi_reduction <add>, %3, %cst [0] : vector<8x128xf32> to vector<128xf32>
    %6 = vector.shape_cast %5 : vector<128xf32> to vector<1x128xf32>
    %7 = arith.addf %4, %6 : vector<1x128xf32>
    %c0_4 = arith.constant 0 : index
    %c0_5 = arith.constant 0 : index
    %8 = vector.load %arg7[%c0_4, %c0_5] : memref<1x128xf32, #tpu.memory_space<vmem>>, vector<1x128xf32>
    tpu.vector_store %arg7[%c0_4, %c0_5], %7 {strides = array<i32>} : memref<1x128xf32, #tpu.memory_space<vmem>>, vector<1x128xf32>,
    %c0_6 = arith.constant 0 : index
    %c0_7 = arith.constant 0 : index
    %9 = vector.load %arg8[%c0_6, %c0_7] : memref<1x128xf32, #tpu.memory_space<vmem>>, vector<1x128xf32>
    %10 = arith.mulf %3, %3 : vector<8x128xf32>
    %cst_8 = arith.constant dense<0.000000e+00> : vector<128xf32>
    %11 = vector.multi_reduction <add>, %10, %cst_8 [0] : vector<8x128xf32> to vector<128xf32>
    %12 = vector.shape_cast %11 : vector<128xf32> to vector<1x128xf32>
    %13 = arith.addf %9, %12 : vector<1x128xf32>
    %c0_9 = arith.constant 0 : index
    %c0_10 = arith.constant 0 : index
    %14 = vector.load %arg8[%c0_9, %c0_10] : memref<1x128xf32, #tpu.memory_space<vmem>>, vector<1x128xf32>
    tpu.vector_store %arg8[%c0_9, %c0_10], %13 {strides = array<i32>} : memref<1x128xf32, #tpu.memory_space<vmem>>, vector<1x128xf32>,
    %c0_i32_11 = arith.constant 0 : i32
    %15 = arith.cmpi eq, %arg1, %c0_i32_11 : i32
    %16 = arith.extui %15 : i1 to i32
    %c0_i32_12 = arith.constant 0 : i32
    %17 = arith.cmpi ne, %16, %c0_i32_12 : i32
    scf.if %17 {
      %c0_13 = arith.constant 0 : index
      %c0_14 = arith.constant 0 : index
      %18 = vector.load %arg7[%c0_13, %c0_14] : memref<1x128xf32, #tpu.memory_space<vmem>>, vector<1x128xf32>
      %cst_15 = arith.constant 1.250000e-01 : f32
      %19 = vector.broadcast %cst_15 : f32 to vector<1x128xf32>
      %20 = arith.mulf %18, %19 : vector<1x128xf32>
      %c0_16 = arith.constant 0 : index
      %c0_17 = arith.constant 0 : index
      %21 = vector.load %arg8[%c0_16, %c0_17] : memref<1x128xf32, #tpu.memory_space<vmem>>, vector<1x128xf32>
      %cst_18 = arith.constant 1.250000e-01 : f32
      %22 = vector.broadcast %cst_18 : f32 to vector<1x128xf32>
      %23 = arith.mulf %21, %22 : vector<1x128xf32>
      %24 = arith.mulf %20, %20 : vector<1x128xf32>
      %25 = arith.subf %23, %24 : vector<1x128xf32>
      %cst_19 = arith.constant 0.000000e+00 : f32
      %26 = vector.broadcast %cst_19 : f32 to vector<1x128xf32>
      %27 = arith.maximumf %25, %26 : vector<1x128xf32>
      %cst_20 = arith.constant 9.99999974E-6 : f32
      %28 = vector.broadcast %cst_20 : f32 to vector<1x128xf32>
      %29 = arith.addf %27, %28 : vector<1x128xf32>
      %30 = math.rsqrt %29 : vector<1x128xf32>
      %c0_21 = arith.constant 0 : index
      %c0_22 = arith.constant 0 : index
      %31 = vector.load %arg3[%c0_21, %c0_22] : memref<1x128xf32, #tpu.memory_space<vmem>>, vector<1x128xf32>
      %32 = arith.mulf %31, %30 : vector<1x128xf32>
      %c0_23 = arith.constant 0 : index
      %c0_24 = arith.constant 0 : index
      %33 = vector.load %arg5[%c0_23, %c0_24] : memref<1x128xf32, #tpu.memory_space<vmem>>, vector<1x128xf32>
      tpu.vector_store %arg5[%c0_23, %c0_24], %32 {strides = array<i32>} : memref<1x128xf32, #tpu.memory_space<vmem>>, vector<1x128xf32>,
      %c0_25 = arith.constant 0 : index
      %c0_26 = arith.constant 0 : index
      %34 = vector.load %arg4[%c0_25, %c0_26] : memref<1x128xf32, #tpu.memory_space<vmem>>, vector<1x128xf32>
      %35 = arith.mulf %20, %32 : vector<1x128xf32>
      %36 = arith.subf %34, %35 : vector<1x128xf32>
      %c0_27 = arith.constant 0 : index
      %c0_28 = arith.constant 0 : index
      %37 = vector.load %arg6[%c0_27, %c0_28] : memref<1x128xf32, #tpu.memory_space<vmem>>, vector<1x128xf32>
      tpu.vector_store %arg6[%c0_27, %c0_28], %36 {strides = array<i32>} : memref<1x128xf32, #tpu.memory_space<vmem>>, vector<1x128xf32>,
    } else {
    }
    return
  }
  func.func @transform_0(%arg0: i32, %arg1: i32) -> (i32, i32) {
    %c0_i32 = arith.constant 0 : i32
    return %arg1, %arg0 : i32, i32
  }
  func.func @transform_1(%arg0: i32, %arg1: i32) -> (i32, i32) {
    %c0_i32 = arith.constant 0 : i32
    %c0_i32_0 = arith.constant 0 : i32
    return %c0_i32, %arg0 : i32, i32
  }
  func.func @transform_2(%arg0: i32, %arg1: i32) -> (i32, i32) {
    %c0_i32 = arith.constant 0 : i32
    %c0_i32_0 = arith.constant 0 : i32
    return %c0_i32, %arg0 : i32, i32
  }
  func.func @transform_3(%arg0: i32, %arg1: i32) -> (i32, i32) {
    %c0_i32 = arith.constant 0 : i32
    %c0_i32_0 = arith.constant 0 : i32
    return %c0_i32, %arg0 : i32, i32
  }
  func.func @transform_4(%arg0: i32, %arg1: i32) -> (i32, i32) {
    %c0_i32 = arith.constant 0 : i32
    %c0_i32_0 = arith.constant 0 : i32
    return %c0_i32, %arg0 : i32, i32
  }
}

module attributes {stable_mosaic.version = 11 : i64} {
  func.func @_preact_matmul_kernel(%arg0: i32, %arg1: i32, %arg2: i32, %arg3: memref<8x128xf32, #tpu.memory_space<vmem>>, %arg4: memref<1x128xf32, #tpu.memory_space<vmem>>, %arg5: memref<1x128xf32, #tpu.memory_space<vmem>>, %arg6: memref<128x128xbf16, #tpu.memory_space<vmem>>, %arg7: memref<8x128xf32, #tpu.memory_space<vmem>>, %arg8: memref<8x128xf32, #tpu.memory_space<vmem>>) attributes {dimension_semantics = [#tpu.dimension_semantics<parallel>, #tpu.dimension_semantics<parallel>, #tpu.dimension_semantics<arbitrary>], iteration_bounds = array<i64: 1, 1, 1>, scalar_prefetch = 0 : i64, scratch_operands = 1 : i64, tpu.core_type = #tpu.core_type<tc>, window_params = [{transform_indices = @transform_0, window_bounds = array<i64: 8, 128>}, {transform_indices = @transform_1, window_bounds = array<i64: 1, 128>}, {transform_indices = @transform_2, window_bounds = array<i64: 1, 128>}, {transform_indices = @transform_3, window_bounds = array<i64: 128, 128>}, {transform_indices = @transform_4, window_bounds = array<i64: 8, 128>}]} {
    %c0_i32 = arith.constant 0 : i32
    %0 = arith.cmpi eq, %arg2, %c0_i32 : i32
    %1 = arith.extui %0 : i1 to i32
    %c0_i32_0 = arith.constant 0 : i32
    %2 = arith.cmpi ne, %1, %c0_i32_0 : i32
    scf.if %2 {
      %cst_15 = arith.constant 0.000000e+00 : f32
      %21 = vector.broadcast %cst_15 : f32 to vector<8x128xf32>
      %c0_16 = arith.constant 0 : index
      %c0_17 = arith.constant 0 : index
      %22 = vector.load %arg8[%c0_16, %c0_17] : memref<8x128xf32, #tpu.memory_space<vmem>>, vector<8x128xf32>
      tpu.vector_store %arg8[%c0_16, %c0_17], %21 {strides = array<i32>} : memref<8x128xf32, #tpu.memory_space<vmem>>, vector<8x128xf32>,
    } else {
    }
    %c0 = arith.constant 0 : index
    %c0_1 = arith.constant 0 : index
    %3 = vector.load %arg3[%c0, %c0_1] : memref<8x128xf32, #tpu.memory_space<vmem>>, vector<8x128xf32>
    %c0_2 = arith.constant 0 : index
    %c0_3 = arith.constant 0 : index
    %4 = vector.load %arg4[%c0_2, %c0_3] : memref<1x128xf32, #tpu.memory_space<vmem>>, vector<1x128xf32>
    %5 = vector.broadcast %4 : vector<1x128xf32> to vector<8x128xf32>
    %6 = arith.mulf %3, %5 : vector<8x128xf32>
    %c0_4 = arith.constant 0 : index
    %c0_5 = arith.constant 0 : index
    %7 = vector.load %arg5[%c0_4, %c0_5] : memref<1x128xf32, #tpu.memory_space<vmem>>, vector<1x128xf32>
    %8 = vector.broadcast %7 : vector<1x128xf32> to vector<8x128xf32>
    %9 = arith.addf %6, %8 : vector<8x128xf32>
    %cst = arith.constant 0.000000e+00 : f32
    %10 = vector.broadcast %cst : f32 to vector<8x128xf32>
    %11 = arith.maximumf %9, %10 : vector<8x128xf32>
    %c0_6 = arith.constant 0 : index
    %c0_7 = arith.constant 0 : index
    %12 = vector.load %arg8[%c0_6, %c0_7] : memref<8x128xf32, #tpu.memory_space<vmem>>, vector<8x128xf32>
    %13 = arith.truncf %11 : vector<8x128xf32> to vector<8x128xbf16>
    %c0_8 = arith.constant 0 : index
    %c0_9 = arith.constant 0 : index
    %14 = vector.load %arg6[%c0_8, %c0_9] : memref<128x128xbf16, #tpu.memory_space<vmem>>, vector<128x128xbf16>
    %cst_10 = arith.constant dense<0.000000e+00> : vector<8x128xf32>
    %15 = tpu.matmul %13, %14, %cst_10 {dimension_numbers = #tpu.dot_dimension_numbers<[1], [0], [0], [1], [0, 0, 1, 1], [], []>} : vector<8x128xbf16>, vector<128x128xbf16>, vector<8x128xf32> -> vector<8x128xf32>
    %16 = arith.addf %12, %15 : vector<8x128xf32>
    %c0_11 = arith.constant 0 : index
    %c0_12 = arith.constant 0 : index
    %17 = vector.load %arg8[%c0_11, %c0_12] : memref<8x128xf32, #tpu.memory_space<vmem>>, vector<8x128xf32>
    tpu.vector_store %arg8[%c0_11, %c0_12], %16 {strides = array<i32>} : memref<8x128xf32, #tpu.memory_space<vmem>>, vector<8x128xf32>,
    %c0_i32_13 = arith.constant 0 : i32
    %18 = arith.cmpi eq, %arg2, %c0_i32_13 : i32
    %19 = arith.extui %18 : i1 to i32
    %c0_i32_14 = arith.constant 0 : i32
    %20 = arith.cmpi ne, %19, %c0_i32_14 : i32
    scf.if %20 {
      %c0_15 = arith.constant 0 : index
      %c0_16 = arith.constant 0 : index
      %21 = vector.load %arg8[%c0_15, %c0_16] : memref<8x128xf32, #tpu.memory_space<vmem>>, vector<8x128xf32>
      %c0_17 = arith.constant 0 : index
      %c0_18 = arith.constant 0 : index
      %22 = vector.load %arg7[%c0_17, %c0_18] : memref<8x128xf32, #tpu.memory_space<vmem>>, vector<8x128xf32>
      tpu.vector_store %arg7[%c0_17, %c0_18], %21 {strides = array<i32>} : memref<8x128xf32, #tpu.memory_space<vmem>>, vector<8x128xf32>,
    } else {
    }
    return
  }
  func.func @transform_0(%arg0: i32, %arg1: i32, %arg2: i32) -> (i32, i32) {
    %c0_i32 = arith.constant 0 : i32
    return %arg0, %arg2 : i32, i32
  }
  func.func @transform_1(%arg0: i32, %arg1: i32, %arg2: i32) -> (i32, i32) {
    %c0_i32 = arith.constant 0 : i32
    %c0_i32_0 = arith.constant 0 : i32
    return %c0_i32, %arg2 : i32, i32
  }
  func.func @transform_2(%arg0: i32, %arg1: i32, %arg2: i32) -> (i32, i32) {
    %c0_i32 = arith.constant 0 : i32
    %c0_i32_0 = arith.constant 0 : i32
    return %c0_i32, %arg2 : i32, i32
  }
  func.func @transform_3(%arg0: i32, %arg1: i32, %arg2: i32) -> (i32, i32) {
    %c0_i32 = arith.constant 0 : i32
    return %arg2, %arg1 : i32, i32
  }
  func.func @transform_4(%arg0: i32, %arg1: i32, %arg2: i32) -> (i32, i32) {
    %c0_i32 = arith.constant 0 : i32
    return %arg0, %arg1 : i32, i32
  }
}

</mosaic_0001>

<llo_original>
// kernel: linear_path_preact.2
$region0: #{linear_path_preact.2}
  #allocation0 [shape = 'u32[]', space=smem, size = 0x4, offset = 0x4, fixed_abs, tag = 'smem constant byte address 0x4 - core index']
  #allocation1 [shape = 'u32[144,128]{1,0:T(1,128)}', space=vmem, size = 0x12000, scoped, tag = 'internal scratch']
  #allocation2 [shape = 'f32[1,128]{1,0:T(1,128)}', space=vmem, size = 0x200, scoped, tag = 'scratch operand']
  #allocation3 [shape = 'f32[1,128]{1,0:T(1,128)}', space=vmem, size = 0x200, scoped, tag = 'scratch operand']
  %s0 = inlined_call_operand.vmem [shape: f32[8,128], index: 0, kind: input, shape index: {}]
  %s1 = inlined_call_operand.vmem [shape: f32[1,128], index: 1, kind: input, shape index: {}]
  %s2 = inlined_call_operand.vmem [shape: f32[1,128], index: 2, kind: input, shape index: {}]
  %s3 = inlined_call_operand.vmem [shape: f32[1,128], index: 3, kind: output, shape index: {0}]
  %s4 = inlined_call_operand.vmem [shape: f32[1,128], index: 4, kind: output, shape index: {1}]
  %5 = xla_tuple %s3, %s4
  %s6 = sld [smem:[#allocation0]]
  $region38: #{linear_path_preact.2} parent=0
    _
  %s8 = ssub.s32 1, %s6
  %s9 = scalar_select 0, %s8, %s6
  // Predicated region
  $region2: #{linear_path_preact.2} parent=0 // pred_check
    _
  $region3: #{linear_path_preact.2} parent=0 // pred_check_branch
    %11 = sbr.rel (0) target = $region5
  $region4: #{linear_path_preact.2} parent=0 // pred_region
    _
  $region5: #{linear_path_preact.2} parent=0 // pred_fallthru
    _
  // Predicated region
  $region6: #{linear_path_preact.2} parent=0 // pred_check
    _
  $region7: #{linear_path_preact.2} parent=0 // pred_check_branch
    %13 = sbr.rel (0) target = $region9
  $region8: #{linear_path_preact.2} parent=0 // pred_region
    _
  $region9: #{linear_path_preact.2} parent=0 // pred_fallthru
    _
  // Predicated region
  $region10: #{linear_path_preact.2} parent=0 // pred_check
    _
  $region11: #{linear_path_preact.2} parent=0 // pred_check_branch
    %15 = sbr.rel (0) target = $region13
  $region12: #{linear_path_preact.2} parent=0 // pred_region
    _
  $region13: #{linear_path_preact.2} parent=0 // pred_fallthru
    _
  %p16 = scmp.eq.s32.totalorder 0, 0
  // Predicated region
  $region14: #{linear_path_preact.2} parent=0 // pred_check
    %p17 = pneg %p16
  $region15: #{linear_path_preact.2} parent=0 // pred_check_branch
    %19 = sbr.rel (%p17) target = $region17
  $region16: #{linear_path_preact.2} parent=0 // pred_region
    %20 = vst [vmem:[#allocation2] sm:$0x1] 0.0
    %21 = vst [vmem:[#allocation3] sm:$0x1] 0.0
  $region17: #{linear_path_preact.2} parent=0 // pred_fallthru
    _
  %v22 = vld [vmem:[%s0] sm:$0xff]
  %v23 = vld [vmem:[#allocation2] sm:$0x1]
  %v24 = vrot.slane %v22, 4
  %v25 = vadd.f32 %v22, %v24
  %v26 = vrot.slane %v25, 2
  %v27 = vadd.f32 %v25, %v26
  %v28 = vrot.slane %v27, 1
  %v29 = vadd.f32 %v27, %v28
  %v30 = vadd.f32 %v23, %v29
  %31 = vst [vmem:[#allocation2] sm:$0x1] %v30
  %v32 = vld [vmem:[#allocation3] sm:$0x1]
  %v33 = vmul.f32 %v22, %v22
  %v34 = vrot.slane %v33, 4
  %v35 = vadd.f32 %v33, %v34
  %v36 = vrot.slane %v35, 2
  %v37 = vadd.f32 %v35, %v36
  %v38 = vrot.slane %v37, 1
  %v39 = vadd.f32 %v37, %v38
  %v40 = vadd.f32 %v32, %v39
  %41 = vst [vmem:[#allocation3] sm:$0x1] %v40
  // Predicated region
  $region18: #{linear_path_preact.2} parent=0 // pred_check
    %p42 = pneg %p16
  $region19: #{linear_path_preact.2} parent=0 // pred_check_branch
    %44 = sbr.rel (%p42) target = $region21
  $region20: #{linear_path_preact.2} parent=0 // pred_region
    %v45 = vld [vmem:[#allocation2] sm:$0x1]
    %v46 = vmul.f32 %v45, 0.125
    %v47 = vld [vmem:[#allocation3] sm:$0x1]
    %v48 = vmul.f32 %v47, 0.125
    %v49 = vmul.f32 %v46, %v46
    %v50 = vsub.f32 %v48, %v49
    %v51 = vmax.f32 %v50, 0.0
    %v52 = vadd.f32 %v51, 1e-05
    %v53 = vrsqrt.pop %v52
    %v54 = vld [vmem:[%s1] sm:$0x1]
    %v55 = vmul.f32 %v54, %v53
    %56 = vst [vmem:[%s3] sm:$0x1] %v55
    %v57 = vld [vmem:[%s2] sm:$0x1]
    %v58 = vmul.f32 %v46, %v55
    %v59 = vsub.f32 %v57, %v58
    %60 = vst [vmem:[%s4] sm:$0x1] %v59
  $region21: #{linear_path_preact.2} parent=0 // pred_fallthru
    _
  // Predicated region
  $region22: #{linear_path_preact.2} parent=0 // pred_check
    _
  $region23: #{linear_path_preact.2} parent=0 // pred_check_branch
    %62 = sbr.rel (0) target = $region25
  $region24: #{linear_path_preact.2} parent=0 // pred_region
    _
  $region25: #{linear_path_preact.2} parent=0 // pred_fallthru
    _
  // Predicated region
  $region26: #{linear_path_preact.2} parent=0 // pred_check
    _
  $region27: #{linear_path_preact.2} parent=0 // pred_check_branch
    %64 = sbr.rel (0) target = $region29
  $region28: #{linear_path_preact.2} parent=0 // pred_region
    _
  $region29: #{linear_path_preact.2} parent=0 // pred_fallthru
    _
  // Predicated region
  $region30: #{linear_path_preact.2} parent=0 // pred_check
    _
  $region31: #{linear_path_preact.2} parent=0 // pred_check_branch
    %66 = sbr.rel (0) target = $region33
  $region32: #{linear_path_preact.2} parent=0 // pred_region
    _
  $region33: #{linear_path_preact.2} parent=0 // pred_fallthru
    _
  // Predicated region
  $region34: #{linear_path_preact.2} parent=0 // pred_check
    _
  $region35: #{linear_path_preact.2} parent=0 // pred_check_branch
    %68 = sbr.rel (0) target = $region37
  $region36: #{linear_path_preact.2} parent=0 // pred_region
    _
  $region37: #{linear_path_preact.2} parent=0 // pred_fallthru
    _

// kernel: linear_path_preact.3
$region0: #{linear_path_preact.3}
  #allocation0 [shape = 'u32[]', space=smem, size = 0x4, offset = 0x4, fixed_abs, tag = 'smem constant byte address 0x4 - core index']
  #allocation1 [shape = 'u32[144,128]{1,0:T(1,128)}', space=vmem, size = 0x12000, scoped, tag = 'internal scratch']
  #allocation2 [shape = 'f32[8,128]{1,0:T(8,128)}', space=vmem, size = 0x1000, scoped, tag = 'scratch operand']
  %s0 = inlined_call_operand.vmem [shape: f32[8,128], index: 0, kind: input, shape index: {}]
  %s1 = inlined_call_operand.vmem [shape: f32[1,128], index: 1, kind: input, shape index: {}]
  %s2 = inlined_call_operand.vmem [shape: f32[1,128], index: 2, kind: input, shape index: {}]
  %s3 = inlined_call_operand.vmem [shape: bf16[128,128], index: 3, kind: input, shape index: {}]
  %s4 = inlined_call_operand.hbm [shape: f32[8,128], index: 4, kind: output, shape index: {}]
  %s5 = sld [smem:[#allocation0]]
  $region34: #{linear_path_preact.3} parent=0
    _
  %s7 = ssub.s32 1, %s5
  %s8 = scalar_select 0, %s7, %s5
  $region1: #{linear_path_preact.3} parent=0
    #allocation3 [shape = 'u8[4096]{0}', space=vmem, size = 0x1000, scoped, tag = 'output window, operand 0, single buffered']
    #allocation4 [shape = 's32[1]{0}', space=sflag, size = 0x4, scoped, tag = 'scoped memory for linear_path_preact.3']
    %9 = vsyncpa [#allocation4], 0
    // Predicated region
    $region2: #{linear_path_preact.3} parent=1 // pred_check
      _
    $region3: #{linear_path_preact.3} parent=1 // pred_check_branch
      %11 = sbr.rel (0) target = $region5
    $region4: #{linear_path_preact.3} parent=1 // pred_region
      _
    $region5: #{linear_path_preact.3} parent=1 // pred_fallthru
      _
    // Predicated region
    $region6: #{linear_path_preact.3} parent=1 // pred_check
      _
    $region7: #{linear_path_preact.3} parent=1 // pred_check_branch
      %13 = sbr.rel (0) target = $region9
    $region8: #{linear_path_preact.3} parent=1 // pred_region
      _
    $region9: #{linear_path_preact.3} parent=1 // pred_fallthru
      _
    // Predicated region
    $region10: #{linear_path_preact.3} parent=1 // pred_check
      _
    $region11: #{linear_path_preact.3} parent=1 // pred_check_branch
      %15 = sbr.rel (0) target = $region13
    $region12: #{linear_path_preact.3} parent=1 // pred_region
      _
    $region13: #{linear_path_preact.3} parent=1 // pred_fallthru
      _
    // Predicated region
    $region14: #{linear_path_preact.3} parent=1 // pred_check
      _
    $region15: #{linear_path_preact.3} parent=1 // pred_check_branch
      %17 = sbr.rel (0) target = $region17
    $region16: #{linear_path_preact.3} parent=1 // pred_region
      _
    $region17: #{linear_path_preact.3} parent=1 // pred_fallthru
      _
    %p19 = scmp.eq.s32.totalorder 0, 0
    // Predicated region
    $region18: #{linear_path_preact.3} parent=1 // pred_check
      %p20 = pneg %p19
    $region19: #{linear_path_preact.3} parent=1 // pred_check_branch
      %22 = sbr.rel (%p20) target = $region21
    $region20: #{linear_path_preact.3} parent=1 // pred_region
      %23 = vst [vmem:[#allocation2] sm:$0xff] 0.0
    $region21: #{linear_path_preact.3} parent=1 // pred_fallthru
      _
    %v24 = vld [vmem:[%s0] sm:$0xff]
    %v25 = vld [vmem:[%s1] sm:$0x1]
    %v27 = vlaneseq
    %v28 = vshrl.u32 %v27, 7
    %v29 = vsub.s32 0, %v28
    %v30 = vrot.slane %v25, %v29
    %v32 = vmul.f32 %v24, %v30
    %v33 = vld [vmem:[%s2] sm:$0x1]
    %v35 = vlaneseq
    %v36 = vshrl.u32 %v35, 7
    %v37 = vsub.s32 0, %v36
    %v38 = vrot.slane %v33, %v37
    %v40 = vadd.f32 %v32, %v38
    %v41 = vmax.f32 %v40, 0.0
    %v42 = vld [vmem:[#allocation2] sm:$0xff]
    %v43 = vpack.c.bf16 %v41, %v41
    %v44 = vld [vmem:[%s3] sm:$0xf]
    %v45 = vld [vmem:[%s3 + $0x4] sm:$0xf]
    %v46 = vld [vmem:[%s3 + $0x8] sm:$0xf]
    %v47 = vld [vmem:[%s3 + $0xc] sm:$0xf]
    %v48 = vld [vmem:[%s3 + $0x10] sm:$0xf]
    %v49 = vld [vmem:[%s3 + $0x14] sm:$0xf]
    %v50 = vld [vmem:[%s3 + $0x18] sm:$0xf]
    %v51 = vld [vmem:[%s3 + $0x1c] sm:$0xf]
    %v52 = vld [vmem:[%s3 + $0x20] sm:$0xf]
    %v53 = vld [vmem:[%s3 + $0x24] sm:$0xf]
    %v54 = vld [vmem:[%s3 + $0x28] sm:$0xf]
    %v55 = vld [vmem:[%s3 + $0x2c] sm:$0xf]
    %v56 = vld [vmem:[%s3 + $0x30] sm:$0xf]
    %v57 = vld [vmem:[%s3 + $0x34] sm:$0xf]
    %v58 = vld [vmem:[%s3 + $0x38] sm:$0xf]
    %v59 = vld [vmem:[%s3 + $0x3c] sm:$0xf]
    %v76 = vunpack.c.l.b16 %v44
    %v77 = vunpack.c.l.b16 %v45
    %v78 = vunpack.c.l.b16 %v46
    %v79 = vunpack.c.l.b16 %v47
    %v80 = vunpack.c.l.b16 %v48
    %v81 = vunpack.c.l.b16 %v49
    %v82 = vunpack.c.l.b16 %v50
    %v83 = vunpack.c.l.b16 %v51
    %v84 = vunpack.c.l.b16 %v52
    %v85 = vunpack.c.l.b16 %v53
    %v86 = vunpack.c.l.b16 %v54
    %v87 = vunpack.c.l.b16 %v55
    %v88 = vunpack.c.l.b16 %v56
    %v89 = vunpack.c.l.b16 %v57
    %v90 = vunpack.c.l.b16 %v58
    %v91 = vunpack.c.l.b16 %v59
    %v92 = vpack.c.b16 %v77, %v76
    %v93 = vpack.c.b16 %v79, %v78
    %v94 = vpack.c.b16 %v81, %v80
    %v95 = vpack.c.b16 %v83, %v82
    %v96 = vpack.c.b16 %v85, %v84
    %v97 = vpack.c.b16 %v87, %v86
    %v98 = vpack.c.b16 %v89, %v88
    %v99 = vpack.c.b16 %v91, %v90
    %108 = vmatprep.subr.bf16.mxu0 0
    %109 = vmatpush1.bf16.msra.mxu0 %v92
    %110 = vmatprep.subr.bf16.mxu0 0
    %111 = vmatpush1.bf16.msra.mxu0 %v93
    %112 = vmatprep.subr.bf16.mxu0 0
    %113 = vmatpush1.bf16.msra.mxu0 %v94
    %114 = vmatprep.subr.bf16.mxu0 0
    %115 = vmatpush1.bf16.msra.mxu0 %v95
    %116 = vmatprep.subr.bf16.mxu0 0
    %117 = vmatpush1.bf16.msra.mxu0 %v96
    %118 = vmatprep.subr.bf16.mxu0 0
    %119 = vmatpush1.bf16.msra.mxu0 %v97
    %120 = vmatprep.subr.bf16.mxu0 0
    %121 = vmatpush1.bf16.msra.mxu0 %v98
    %122 = vmatprep.subr.bf16.mxu0 0
    %123 = vmatpush1.bf16.msra.mxu0 %v99
    %124 = vmatprep.subr.bf16.mxu0 0
    %125 = vmatpush1.bf16.msra.mxu0 0
    %126 = vmatprep.subr.bf16.mxu0 0
    %127 = vmatpush1.bf16.msra.mxu0 0
    %128 = vmatprep.subr.bf16.mxu0 0
    %129 = vmatpush1.bf16.msra.mxu0 0
    %130 = vmatprep.subr.bf16.mxu0 0
    %131 = vmatpush1.bf16.msra.mxu0 0
    %132 = vmatprep.subr.bf16.mxu0 0
    %133 = vmatpush1.bf16.msra.mxu0 0
    %134 = vmatprep.subr.bf16.mxu0 0
    %135 = vmatpush1.bf16.msra.mxu0 0
    %136 = vmatprep.subr.bf16.mxu0 0
    %137 = vmatpush1.bf16.msra.mxu0 0
    %138 = vmatprep.subr.bf16.mxu0 0
    %139 = vmatpush1.bf16.msra.mxu0 0
    %140 = vmatprep.mubr.bf16.mxu0 0
    %141 = vmatmul.mubr.bf16.gmra.mrb[0].mxu0 %v43
    %v142 = vpop.f32.mrb[0].mxu0
    %v143 = vadd.f32 0.0, %v142
    %v144 = vpop.f32.mrb[0].mxu0
    %v145 = vpop.f32.mrb[0].mxu0
    %v146 = vpop.f32.mrb[0].mxu0
    %147 = vdwg.mxu0
    %v148 = vadd.f32 %v42, %v143
    %149 = vst [vmem:[#allocation2] sm:$0xff] %v148
    // Predicated region
    $region22: #{linear_path_preact.3} parent=1 // pred_check
      %p150 = pneg %p19
    $region23: #{linear_path_preact.3} parent=1 // pred_check_branch
      %152 = sbr.rel (%p150) target = $region25
    $region24: #{linear_path_preact.3} parent=1 // pred_region
      %v153 = vld [vmem:[#allocation2] sm:$0xff]
      %154 = vst [vmem:[#allocation3] sm:$0xff] %v153
    $region25: #{linear_path_preact.3} parent=1 // pred_fallthru
      _
    // Predicated region
    $region26: #{linear_path_preact.3} parent=1 // pred_check
      _
    $region27: #{linear_path_preact.3} parent=1 // pred_check_branch
      %156 = sbr.rel (0) target = $region29
    $region28: #{linear_path_preact.3} parent=1 // pred_region
      %s158 = ssub.s32 128, 128
      %159 = vsyncadd [#allocation4], %s158
      %s161 = sshll.u32 [#allocation3], 4
      %s162 = int_to_ptr.vmem [resolvable:$true] %s161
      %164 = dma.vmem_to_hbm [thread:$0]  %s162, 128, %s4, [#allocation4]
    $region29: #{linear_path_preact.3} parent=1 // pred_fallthru
      _
    // Predicated region
    $region30: #{linear_path_preact.3} parent=1 // pred_check
      _
    $region31: #{linear_path_preact.3} parent=1 // pred_check_branch
      %166 = sbr.rel (0) target = $region33
    $region32: #{linear_path_preact.3} parent=1 // pred_region
      %167 = dma.done [#allocation4], 128
    $region33: #{linear_path_preact.3} parent=1 // pred_fallthru
      _
    %168 = vsyncpa [#allocation4], 1

</llo_original>
